<compile_context>
chip_gen: v7x
topology: tpu7x:2x2x1
jax: 0.10.0
libtpu: 0.0.40
codegen_flags: <defaults>
</compile_context>

<pallas_src>
import math

import jax
import jax.numpy as jnp
from jax.experimental import pallas as pl
from jax.experimental.pallas import tpu as pltpu


def _patch_embed_kernel(p_ref, w_ref, add_ref, o_ref):
    # p_ref:   (tm, Kg)   packed patch rows
    # w_ref:   (Kg, Eg)   flattened conv weight (block-diagonal when packing);
    #                     constant block index -> stays VMEM-resident across steps
    # add_ref: (tm, Eg)   pre-fused conv bias + positional embedding (f32)
    # o_ref:   (tm, Eg)   lane-dense output tile
    acc = jnp.dot(p_ref[...], w_ref[...],
                  preferred_element_type=jnp.float32)      # MXU
    o_ref[...] = (acc + add_ref[...]).astype(o_ref.dtype)  # single VPU add


def embedding_layer(x, conv_w, conv_b, cls_tok, pos, patch, *, use_bf16=False):
    """x: (B, C, H, W) float32 (NCHW, same as PyTorch).
    conv_w: (E, C, p, p), conv_b: (E,), cls_tok: (1, 1, E), pos: (1, N+1, E).
    Returns (B, N+1, E)."""
    B, C, H, W = x.shape
    E = conv_w.shape[0]
    p = patch
    nh, nw = H // p, W // p
    N = nh * nw
    K = C * p * p
    M = B * N

    # --- patch extraction (kernel_size == stride -> per-patch linear) -------
    # Pure data movement; stays in XLA.
    # TODO(synk): for production ViT sizes, accept NHWC input (reshape only)
    # or fuse this rearrange into the pallas_call (allow_input_fusion) to
    # avoid the extra HBM round trip of x.
    patches = x.reshape(B, C, nh, p, nw, p)
    patches = patches.transpose(0, 2, 4, 1, 3, 5).reshape(M, K)
    patches = patches.astype(jnp.float32)

    w = conv_w.reshape(E, K).T.astype(jnp.float32)               # (K, E)

    # Batch-independent constants, hoisted out of the kernel.
    add_term = pos[0, 1:, :] + conv_b[None, :]                   # (N, E): bias fused
    # TODO(synk): add_term is broadcast across batches; for very large B this
    # HBM materialization could be avoided with a per-batch grid axis whose
    # add-BlockSpec index is constant (kept VMEM-resident).
    add_term = jnp.broadcast_to(add_term[None], (B, N, E)).reshape(M, E)
    add_term = add_term.astype(jnp.float32)
    cls_row = (cls_tok.reshape(1, E) + pos[0, :1, :]).astype(jnp.float32)

    # --- lane-dense packing when E < 128 -------------------------------------
    if E % 128 == 0:
        g = 1
    else:
        g = 128 // math.gcd(E, 128)       # g*E is a multiple of 128
        if M % g != 0:
            g = 1                         # fall back (masked stores, still correct)
    Mg, Kg, Eg = M // g, K * g, E * g

    patches_g = patches.reshape(Mg, Kg)   # contiguous reshape (free in XLA)
    add_g = add_term.reshape(Mg, Eg)
    if g == 1:
        w_g = w
    else:
        # Block-diagonal weight: packed group j -> output lanes [j*E, (j+1)*E).
        w_g = jnp.kron(jnp.eye(g, dtype=w.dtype), w)             # (Kg, Eg)

    if use_bf16:
        # bf16 MXU inputs (recommended on v6e/v7x); accumulate in f32.
        patches_g = patches_g.astype(jnp.bfloat16)
        w_g = w_g.astype(jnp.bfloat16)

    # --- row tiling over the fused (B*N) dimension ----------------------------
    tm = Mg                                # toy shapes: one grid step, all resident
    for cand in (512, 256, 128):
        if Mg % cand == 0 and Mg > cand:
            tm = cand
            break
    grid_m = Mg // tm

    grid_spec = pltpu.PrefetchScalarGridSpec(
        num_scalar_prefetch=0,
        grid=(grid_m,),
        in_specs=[
            pl.BlockSpec((tm, Kg), lambda i: (i, 0)),   # packed patches
            pl.BlockSpec((Kg, Eg), lambda i: (0, 0)),   # weight (resident, not re-fetched)
            pl.BlockSpec((tm, Eg), lambda i: (i, 0)),   # fused bias + pos
        ],
        out_specs=pl.BlockSpec((tm, Eg), lambda i: (i, 0)),
    )

    out_flat = pl.pallas_call(
        _patch_embed_kernel,
        out_shape=jax.ShapeDtypeStruct((Mg, Eg), jnp.float32),
        grid_spec=grid_spec,
        compiler_params=pltpu.CompilerParams(
            dimension_semantics=("parallel",)),
    )(patches_g, w_g, add_g)

    # Un-pack and attach the (constant) cls row in plain XLA.
    emb = out_flat.reshape(B, N, E)
    cls_full = jnp.broadcast_to(cls_row[None, :, :], (B, 1, E))
    return jnp.concatenate([cls_full, emb], axis=1)


def _reference(x, conv_w, conv_b, cls_tok, pos, patch):
    # Pure-JAX reference using a real strided convolution (matches PyTorch).
    y = jax.lax.conv_general_dilated(
        x, conv_w, window_strides=(patch, patch), padding="VALID",
        dimension_numbers=("NCHW", "OIHW", "NCHW"))
    y = y + conv_b[None, :, None, None]
    B, E = y.shape[0], y.shape[1]
    y = y.reshape(B, E, -1).transpose(0, 2, 1)                   # (B, N, E)
    cls_rep = jnp.broadcast_to(cls_tok, (B, 1, E))
    y = jnp.concatenate([cls_rep, y], axis=1)
    return y + pos


if __name__ == "__main__":
    # config: n_channels=4, embedding_dim=32, patch=4, img_size=16
    B, C, H, W = 2, 4, 16, 16
    E, P = 32, 4
    N = (H // P) * (W // P)

    key = jax.random.PRNGKey(0)
    k1, k2, k3, k4, k5 = jax.random.split(key, 5)
    x = jax.random.normal(k1, (B, C, H, W), dtype=jnp.float32)
    conv_w = jax.random.normal(k2, (E, C, P, P), dtype=jnp.float32) * 0.05
    conv_b = jax.random.normal(k3, (E,), dtype=jnp.float32) * 0.05
    # PyTorch inits cls/pos to zeros; use small nonzero values so the add path
    # is exercised (shapes identical to the module's parameters).
    cls_tok = jax.random.normal(k4, (1, 1, E), dtype=jnp.float32) * 0.02
    pos = jax.random.normal(k5, (1, N + 1, E), dtype=jnp.float32) * 0.02

    ref = _reference(x, conv_w, conv_b, cls_tok, pos, P)

    # f32 path (exact check).
    out = embedding_layer(x, conv_w, conv_b, cls_tok, pos, P)
    out = jax.block_until_ready(out)
    assert out.shape == (B, N + 1, E)
    assert jnp.allclose(out, ref, atol=1e-4, rtol=1e-4), \
        float(jnp.max(jnp.abs(out - ref)))

    # bf16 MXU-input path (v6e/v7x recommendation); looser tolerance.
    out_bf16 = jax.block_until_ready(
        embedding_layer(x, conv_w, conv_b, cls_tok, pos, P, use_bf16=True))
    assert jnp.allclose(out_bf16, ref, atol=5e-2, rtol=5e-2), \
        float(jnp.max(jnp.abs(out_bf16 - ref)))

    print("KERNEL_OK")
</pallas_src>

<mosaic_0001>
module attributes {stable_mosaic.version = 11 : i64} {
  func.func @_patch_embed_kernel(%arg0: i32, %arg1: memref<8x256xf32, #tpu.memory_space<vmem>>, %arg2: memref<256x128xf32, #tpu.memory_space<vmem>>, %arg3: memref<8x128xf32, #tpu.memory_space<vmem>>, %arg4: memref<8x128xf32, #tpu.memory_space<vmem>>) attributes {dimension_semantics = [#tpu.dimension_semantics<parallel>], iteration_bounds = array<i64: 1>, scalar_prefetch = 0 : i64, scratch_operands = 0 : i64, tpu.core_type = #tpu.core_type<tc>, window_params = [{transform_indices = @transform_0, window_bounds = array<i64: 8, 256>}, {pipeline_mode = #tpu.pipeline_mode<synchronous>, transform_indices = @transform_1, window_bounds = array<i64: 256, 128>}, {transform_indices = @transform_2, window_bounds = array<i64: 8, 128>}, {transform_indices = @transform_3, window_bounds = array<i64: 8, 128>}]} {
    %c0 = arith.constant 0 : index
    %c0_0 = arith.constant 0 : index
    %0 = vector.load %arg1[%c0, %c0_0] : memref<8x256xf32, #tpu.memory_space<vmem>>, vector<8x256xf32>
    %c0_1 = arith.constant 0 : index
    %c0_2 = arith.constant 0 : index
    %1 = vector.load %arg2[%c0_1, %c0_2] : memref<256x128xf32, #tpu.memory_space<vmem>>, vector<256x128xf32>
    %cst = arith.constant dense<0.000000e+00> : vector<8x128xf32>
    %2 = tpu.matmul %0, %1, %cst {dimension_numbers = #tpu.dot_dimension_numbers<[1], [0], [0], [1], [0, 0, 1, 1], [], []>} : vector<8x256xf32>, vector<256x128xf32>, vector<8x128xf32> -> vector<8x128xf32>
    %c0_3 = arith.constant 0 : index
    %c0_4 = arith.constant 0 : index
    %3 = vector.load %arg3[%c0_3, %c0_4] : memref<8x128xf32, #tpu.memory_space<vmem>>, vector<8x128xf32>
    %4 = arith.addf %2, %3 : vector<8x128xf32>
    %c0_5 = arith.constant 0 : index
    %c0_6 = arith.constant 0 : index
    %5 = vector.load %arg4[%c0_5, %c0_6] : memref<8x128xf32, #tpu.memory_space<vmem>>, vector<8x128xf32>
    tpu.vector_store %arg4[%c0_5, %c0_6], %4 {strides = array<i32>} : memref<8x128xf32, #tpu.memory_space<vmem>>, vector<8x128xf32>,
    return
  }
  func.func @transform_0(%arg0: i32) -> (i32, i32) {
    %c0_i32 = arith.constant 0 : i32
    %c0_i32_0 = arith.constant 0 : i32
    return %arg0, %c0_i32 : i32, i32
  }
  func.func @transform_1(%arg0: i32) -> (i32, i32) {
    %c0_i32 = arith.constant 0 : i32
    %c0_i32_0 = arith.constant 0 : i32
    %c0_i32_1 = arith.constant 0 : i32
    return %c0_i32, %c0_i32_0 : i32, i32
  }
  func.func @transform_2(%arg0: i32) -> (i32, i32) {
    %c0_i32 = arith.constant 0 : i32
    %c0_i32_0 = arith.constant 0 : i32
    return %arg0, %c0_i32 : i32, i32
  }
  func.func @transform_3(%arg0: i32) -> (i32, i32) {
    %c0_i32 = arith.constant 0 : i32
    %c0_i32_0 = arith.constant 0 : i32
    return %arg0, %c0_i32 : i32, i32
  }
}

</mosaic_0001>

<llo_original>
// kernel: tpu_custom_call.1
$region0: #{tpu_custom_call.1}
  #allocation0 [shape = 'u32[]', space=smem, size = 0x4, offset = 0x4, fixed_abs, tag = 'smem constant byte address 0x4 - core index']
  #allocation1 [shape = 'u32[144,128]{1,0:T(1,128)}', space=vmem, size = 0x12000, scoped, tag = 'internal scratch']
  %s0 = inlined_call_operand.hbm [shape: f32[8,256], index: 0, kind: input, shape index: {}]
  %s1 = inlined_call_operand.hbm [shape: f32[256,128], index: 1, kind: input, shape index: {}]
  %s2 = inlined_call_operand.hbm [shape: f32[8,128], index: 2, kind: input, shape index: {}]
  %s3 = inlined_call_operand.hbm [shape: f32[8,128], index: 3, kind: output, shape index: {}]
  %s4 = sld [smem:[#allocation0]]
  $region34: #{tpu_custom_call.1} parent=0
    _
  %s6 = ssub.s32 1, %s4
  %s7 = scalar_select 0, %s6, %s4
  $region1: #{tpu_custom_call.1} parent=0
    #allocation2 [shape = 'u8[8192]{0}', space=vmem, size = 0x2000, scoped, tag = 'input window, operand 0, single buffered']
    #allocation3 [shape = 's32[1]{0}', space=sflag, size = 0x4, scoped, tag = 'scoped memory for tpu_custom_call.1']
    #allocation4 [shape = 's32[1]{0}', space=sflag, size = 0x4, scoped, tag = 'scoped memory for tpu_custom_call.1']
    #allocation5 [shape = 'u8[131072]{0}', space=vmem, size = 0x20000, scoped, tag = 'input window, operand 1, single buffered']
    #allocation6 [shape = 's32[1]{0}', space=sflag, size = 0x4, scoped, tag = 'scoped memory for tpu_custom_call.1']
    #allocation7 [shape = 'u8[4096]{0}', space=vmem, size = 0x1000, scoped, tag = 'input window, operand 2, single buffered']
    #allocation8 [shape = 'u8[4096]{0}', space=vmem, size = 0x1000, scoped, tag = 'output window, operand 0, single buffered']
    %8 = vsyncpa [#allocation3], 0
    %9 = vsyncpa [#allocation6], 0
    %10 = vsyncpa [#allocation4], 0
    // Predicated region
    $region2: #{tpu_custom_call.1} parent=1 // pred_check
      _
    $region3: #{tpu_custom_call.1} parent=1 // pred_check_branch
      %12 = sbr.rel (0) target = $region5
    $region4: #{tpu_custom_call.1} parent=1 // pred_region
      %s14 = ssub.s32 256, 256
      %15 = vsyncadd [#allocation3], %s14
      %s17 = sshll.u32 [#allocation2], 4
      %s18 = int_to_ptr.vmem [resolvable:$true] %s17
      %20 = dma.hbm_to_vmem [thread:$0]  %s0, 256, %s18, [#allocation3]
    $region5: #{tpu_custom_call.1} parent=1 // pred_fallthru
      _
    // Predicated region
    $region6: #{tpu_custom_call.1} parent=1 // pred_check
      _
    $region7: #{tpu_custom_call.1} parent=1 // pred_check_branch
      %22 = sbr.rel (0) target = $region9
    $region8: #{tpu_custom_call.1} parent=1 // pred_region
      %s24 = ssub.s32 4096, 4096
      %25 = vsyncadd [#allocation6], %s24
      %s26 = sshll.u32 [#allocation5], 4
      %s27 = int_to_ptr.vmem [resolvable:$true] %s26
      %32 = dma.hbm_to_vmem [thread:$0]  %s1, 4096, %s27, [#allocation6], 128, 128, 8
    $region9: #{tpu_custom_call.1} parent=1 // pred_fallthru
      _
    // Predicated region
    $region10: #{tpu_custom_call.1} parent=1 // pred_check
      _
    $region11: #{tpu_custom_call.1} parent=1 // pred_check_branch
      %34 = sbr.rel (0) target = $region13
    $region12: #{tpu_custom_call.1} parent=1 // pred_region
      %s36 = ssub.s32 128, 128
      %37 = vsyncadd [#allocation6], %s36
      %s39 = sshll.u32 [#allocation7], 4
      %s40 = int_to_ptr.vmem [resolvable:$true] %s39
      %42 = dma.hbm_to_vmem [thread:$0]  %s2, 128, %s40, [#allocation6]
    $region13: #{tpu_custom_call.1} parent=1 // pred_fallthru
      _
    // Predicated region
    $region14: #{tpu_custom_call.1} parent=1 // pred_check
      _
    $region15: #{tpu_custom_call.1} parent=1 // pred_check_branch
      %44 = sbr.rel (0) target = $region17
    $region16: #{tpu_custom_call.1} parent=1 // pred_region
      %45 = dma.done [#allocation3], 256
    $region17: #{tpu_custom_call.1} parent=1 // pred_fallthru
      _
    // Predicated region
    $region18: #{tpu_custom_call.1} parent=1 // pred_check
      _
    $region19: #{tpu_custom_call.1} parent=1 // pred_check_branch
      %47 = sbr.rel (0) target = $region21
    $region20: #{tpu_custom_call.1} parent=1 // pred_region
      %48 = dma.done [#allocation6], 4096
    $region21: #{tpu_custom_call.1} parent=1 // pred_fallthru
      _
    // Predicated region
    $region22: #{tpu_custom_call.1} parent=1 // pred_check
      _
    $region23: #{tpu_custom_call.1} parent=1 // pred_check_branch
      %50 = sbr.rel (0) target = $region25
    $region24: #{tpu_custom_call.1} parent=1 // pred_region
      %51 = dma.done [#allocation6], 128
    $region25: #{tpu_custom_call.1} parent=1 // pred_fallthru
      _
    %v52 = vld [vmem:[#allocation2] sm:$0xff]
    %v53 = vld [vmem:[#allocation2 + $0x8] sm:$0xff]
    %v54 = vld [vmem:[#allocation5] sm:$0xff]
    %v55 = vld [vmem:[#allocation5 + $0x8] sm:$0xff]
    %v56 = vld [vmem:[#allocation5 + $0x10] sm:$0xff]
    %v57 = vld [vmem:[#allocation5 + $0x18] sm:$0xff]
    %v58 = vld [vmem:[#allocation5 + $0x20] sm:$0xff]
    %v59 = vld [vmem:[#allocation5 + $0x28] sm:$0xff]
    %v60 = vld [vmem:[#allocation5 + $0x30] sm:$0xff]
    %v61 = vld [vmem:[#allocation5 + $0x38] sm:$0xff]
    %v62 = vld [vmem:[#allocation5 + $0x40] sm:$0xff]
    %v63 = vld [vmem:[#allocation5 + $0x48] sm:$0xff]
    %v64 = vld [vmem:[#allocation5 + $0x50] sm:$0xff]
    %v65 = vld [vmem:[#allocation5 + $0x58] sm:$0xff]
    %v66 = vld [vmem:[#allocation5 + $0x60] sm:$0xff]
    %v67 = vld [vmem:[#allocation5 + $0x68] sm:$0xff]
    %v68 = vld [vmem:[#allocation5 + $0x70] sm:$0xff]
    %v69 = vld [vmem:[#allocation5 + $0x78] sm:$0xff]
    %v70 = vld [vmem:[#allocation5 + $0x80] sm:$0xff]
    %v71 = vld [vmem:[#allocation5 + $0x88] sm:$0xff]
    %v72 = vld [vmem:[#allocation5 + $0x90] sm:$0xff]
    %v73 = vld [vmem:[#allocation5 + $0x98] sm:$0xff]
    %v74 = vld [vmem:[#allocation5 + $0xa0] sm:$0xff]
    %v75 = vld [vmem:[#allocation5 + $0xa8] sm:$0xff]
    %v76 = vld [vmem:[#allocation5 + $0xb0] sm:$0xff]
    %v77 = vld [vmem:[#allocation5 + $0xb8] sm:$0xff]
    %v78 = vld [vmem:[#allocation5 + $0xc0] sm:$0xff]
    %v79 = vld [vmem:[#allocation5 + $0xc8] sm:$0xff]
    %v80 = vld [vmem:[#allocation5 + $0xd0] sm:$0xff]
    %v81 = vld [vmem:[#allocation5 + $0xd8] sm:$0xff]
    %v82 = vld [vmem:[#allocation5 + $0xe0] sm:$0xff]
    %v83 = vld [vmem:[#allocation5 + $0xe8] sm:$0xff]
    %v84 = vld [vmem:[#allocation5 + $0xf0] sm:$0xff]
    %v85 = vld [vmem:[#allocation5 + $0xf8] sm:$0xff]
    %v86 = vld [vmem:[#allocation7] sm:$0xff]
    %87 = vmatprep.subr.mxu0 0.0
    %88 = vmatpush1.msra.mxu0 %v54
    %89 = vmatprep.subr.mxu0 0.0
    %90 = vmatpush1.msra.mxu0 %v55
    %91 = vmatprep.subr.mxu0 0.0
    %92 = vmatpush1.msra.mxu0 %v56
    %93 = vmatprep.subr.mxu0 0.0
    %94 = vmatpush1.msra.mxu0 %v57
    %95 = vmatprep.subr.mxu0 0.0
    %96 = vmatpush1.msra.mxu0 %v58
    %97 = vmatprep.subr.mxu0 0.0
    %98 = vmatpush1.msra.mxu0 %v59
    %99 = vmatprep.subr.mxu0 0.0
    %100 = vmatpush1.msra.mxu0 %v60
    %101 = vmatprep.subr.mxu0 0.0
    %102 = vmatpush1.msra.mxu0 %v61
    %103 = vmatprep.subr.mxu0 0.0
    %104 = vmatpush1.msra.mxu0 %v62
    %105 = vmatprep.subr.mxu0 0.0
    %106 = vmatpush1.msra.mxu0 %v63
    %107 = vmatprep.subr.mxu0 0.0
    %108 = vmatpush1.msra.mxu0 %v64
    %109 = vmatprep.subr.mxu0 0.0
    %110 = vmatpush1.msra.mxu0 %v65
    %111 = vmatprep.subr.mxu0 0.0
    %112 = vmatpush1.msra.mxu0 %v66
    %113 = vmatprep.subr.mxu0 0.0
    %114 = vmatpush1.msra.mxu0 %v67
    %115 = vmatprep.subr.mxu0 0.0
    %116 = vmatpush1.msra.mxu0 %v68
    %117 = vmatprep.subr.mxu0 0.0
    %118 = vmatpush1.msra.mxu0 %v69
    %119 = vmatprep.subr.mxu0 0.0
    %120 = vmatpush1.msra.mxu0 %v70
    %121 = vmatprep.subr.mxu0 0.0
    %122 = vmatpush1.msra.mxu0 %v71
    %123 = vmatprep.subr.mxu0 0.0
    %124 = vmatpush1.msra.mxu0 %v72
    %125 = vmatprep.subr.mxu0 0.0
    %126 = vmatpush1.msra.mxu0 %v73
    %127 = vmatprep.subr.mxu0 0.0
    %128 = vmatpush1.msra.mxu0 %v74
    %129 = vmatprep.subr.mxu0 0.0
    %130 = vmatpush1.msra.mxu0 %v75
    %131 = vmatprep.subr.mxu0 0.0
    %132 = vmatpush1.msra.mxu0 %v76
    %133 = vmatprep.subr.mxu0 0.0
    %134 = vmatpush1.msra.mxu0 %v77
    %135 = vmatprep.subr.mxu0 0.0
    %136 = vmatpush1.msra.mxu0 %v78
    %137 = vmatprep.subr.mxu0 0.0
    %138 = vmatpush1.msra.mxu0 %v79
    %139 = vmatprep.subr.mxu0 0.0
    %140 = vmatpush1.msra.mxu0 %v80
    %141 = vmatprep.subr.mxu0 0.0
    %142 = vmatpush1.msra.mxu0 %v81
    %143 = vmatprep.subr.mxu0 0.0
    %144 = vmatpush1.msra.mxu0 %v82
    %145 = vmatprep.subr.mxu0 0.0
    %146 = vmatpush1.msra.mxu0 %v83
    %147 = vmatprep.subr.mxu0 0.0
    %148 = vmatpush1.msra.mxu0 %v84
    %149 = vmatprep.subr.mxu0 0.0
    %150 = vmatpush1.msra.mxu0 %v85
    %151 = vmatprep.mubr.f32.mxu0 %v53
    %152 = vmatmul.mubr.f32.gmra.mrb[0].mxu0 %v52
    %v153 = vpop.f32.mrb[0].mxu0
    %v154 = vadd.f32 %v86, %v153
    %v155 = vpop.f32.mrb[0].mxu0
    %156 = vdwg.mxu0
    %157 = vst [vmem:[#allocation8] sm:$0xff] %v154
    // Predicated region
    $region26: #{tpu_custom_call.1} parent=1 // pred_check
      _
    $region27: #{tpu_custom_call.1} parent=1 // pred_check_branch
      %159 = sbr.rel (0) target = $region29
    $region28: #{tpu_custom_call.1} parent=1 // pred_region
      %s161 = ssub.s32 128, 128
      %162 = vsyncadd [#allocation4], %s161
      %s164 = sshll.u32 [#allocation8], 4
      %s165 = int_to_ptr.vmem [resolvable:$true] %s164
      %167 = dma.vmem_to_hbm [thread:$0]  %s165, 128, %s3, [#allocation4]
    $region29: #{tpu_custom_call.1} parent=1 // pred_fallthru
      _
    // Predicated region
    $region30: #{tpu_custom_call.1} parent=1 // pred_check
      _
    $region31: #{tpu_custom_call.1} parent=1 // pred_check_branch
      %169 = sbr.rel (0) target = $region33
    $region32: #{tpu_custom_call.1} parent=1 // pred_region
      %170 = dma.done [#allocation4], 128
    $region33: #{tpu_custom_call.1} parent=1 // pred_fallthru
      _
    %171 = vsyncpa [#allocation3], 1
    %172 = vsyncpa [#allocation6], 1
    %173 = vsyncpa [#allocation4], 1

</llo_original>
